<compile_context>
chip_gen: v5e
topology: v5e:2x2
jax: 0.10.0
libtpu: 0.0.40
codegen_flags: <defaults>
</compile_context>

<pallas_src>
import functools

import jax
import jax.numpy as jnp
from jax import lax
from jax.experimental import pallas as pl
from jax.experimental.pallas import tpu as pltpu


def _round_up(n, m):
    return ((n + m - 1) // m) * m


def _zdisc_kernel(panel, x_ref, w1_ref, b1_ref, w2_ref, b2_ref, w3_ref, b3_ref,
                  o_ref):
    """One batch tile.  Loops over `panel`-row sub-panels to bound live vregs."""
    n_panels = x_ref.shape[0] // panel

    def body(p, carry):
        row = p * panel
        # In-kernel bf16 cast of the input slab (VPU op, no extra HBM pass).
        xs = x_ref[pl.ds(row, panel), :].astype(jnp.bfloat16)

        # ----- linear1: bf16 MXU matmul, f32 accumulate; bias + leaky_relu in
        #       bf16 (packed VALU) and fed straight into linear2 -----
        h = jnp.dot(xs, w1_ref[...], preferred_element_type=jnp.float32)
        h = h.astype(jnp.bfloat16) + b1_ref[...]
        h = jnp.maximum(h, 0.2 * h)

        # ----- linear2: bf16 MXU matmul, f32 accumulate; bias + leaky_relu in
        #       f32 -----
        h = jnp.dot(h, w2_ref[...], preferred_element_type=jnp.float32)
        h = h + b2_ref[...]
        h = jnp.maximum(h, 0.2 * h)

        # ----- linear3 (output dim 1): VPU multiply + XLU lane-reduce; the MXU
        #       stays free -----
        h3 = jnp.sum(h * w3_ref[...], axis=-1, keepdims=True) + b3_ref[0, 0]

        # Exact sigmoid (only [panel, 1] elements -- cost is negligible).
        sig = 1.0 / (1.0 + jnp.exp(-h3))
        o_ref[pl.ds(row, panel), :] = sig.astype(o_ref.dtype)
        return carry

    lax.fori_loop(0, n_panels, body, 0, unroll=True)


def _choose_tile(batch, tile_b):
    """Batch tile: multiple of 8, <= tile_b, and <= ceil(B/2) (rounded up to 8)
    so the grid has >= 2 steps whenever possible (v7x megacore)."""
    half = _round_up(max(-(-batch // 2), 8), 8)
    return max(8, min(tile_b, half))


@functools.partial(jax.jit, static_argnames=("tile_b",))
def zdiscriminator_forward(x, params, tile_b=1024):
    """x: [B, z_size].  params: dict of w1,b1,w2,b2,w3,b3 ([in, out] layout)."""
    # Param casts are one-time / tiny (total < 100 KiB); keep them in the wrapper.
    w1 = params["w1"].astype(jnp.bfloat16)                  # [z, d]
    b1 = params["b1"].reshape(1, -1).astype(jnp.bfloat16)   # [1, d]
    w2 = params["w2"].astype(jnp.bfloat16)                  # [d, d]
    b2 = params["b2"].reshape(1, -1).astype(jnp.float32)    # [1, d]
    w3 = params["w3"].reshape(1, -1).astype(jnp.float32)    # [1, d] row (VPU path)
    b3 = params["b3"].reshape(1, 1).astype(jnp.float32)     # scalar -> SMEM

    B, z = x.shape
    d = w1.shape[1]

    tb = _choose_tile(B, tile_b)
    num_tiles = pl.cdiv(B, tb)          # ragged last block handled by Pallas

    # Compute panel inside the kernel (bounds live ranges; must divide tb).
    if tb % 256 == 0:
        panel = 256
    elif tb % 128 == 0:
        panel = 128
    else:
        panel = tb

    resident = lambda i: (0, 0)          # weights/biases: same block every step

    out = pl.pallas_call(
        functools.partial(_zdisc_kernel, panel),
        out_shape=jax.ShapeDtypeStruct((B, 1), jnp.float32),
        grid_spec=pltpu.PrefetchScalarGridSpec(
            num_scalar_prefetch=0,
            grid=(num_tiles,),
            in_specs=[
                pl.BlockSpec((tb, z), lambda i: (i, 0)),        # x tile (native dtype)
                pl.BlockSpec((z, d), resident),                 # w1
                pl.BlockSpec((1, d), resident),                 # b1
                pl.BlockSpec((d, d), resident),                 # w2
                pl.BlockSpec((1, d), resident),                 # b2
                pl.BlockSpec((1, d), resident),                 # w3 row
                pl.BlockSpec(memory_space=pltpu.MemorySpace.SMEM),  # b3 scalar
            ],
            out_specs=pl.BlockSpec((tb, 1), lambda i: (i, 0)),
        ),
        compiler_params=pltpu.CompilerParams(
            dimension_semantics=("parallel",),
        ),
    )(x, w1, b1, w2, b2, w3, b3)

    return out


def init_params(key, z_size, d=128, mean=0.0, std=0.02):
    """Mirrors normal_init(m, mean, std): weights ~ N(mean, std), bias = 0."""
    k1, k2, k3 = jax.random.split(key, 3)
    # Stored as [in, out] (transposed vs. PyTorch's [out, in]).
    return {
        "w1": mean + std * jax.random.normal(k1, (z_size, d), jnp.float32),
        "b1": jnp.zeros((1, d), jnp.float32),
        "w2": mean + std * jax.random.normal(k2, (d, d), jnp.float32),
        "b2": jnp.zeros((1, d), jnp.float32),
        "w3": mean + std * jax.random.normal(k3, (d, 1), jnp.float32),
        "b3": jnp.zeros((1, 1), jnp.float32),
    }


def _reference_f32(x, p):
    h = x @ p["w1"] + p["b1"]
    h = jnp.where(h >= 0, h, 0.2 * h)
    h = h @ p["w2"] + p["b2"]
    h = jnp.where(h >= 0, h, 0.2 * h)
    h = h @ p["w3"] + p["b3"]
    return jax.nn.sigmoid(h)


if __name__ == "__main__":
    key = jax.random.PRNGKey(0)
    kx, kx2, kx3, kp = jax.random.split(key, 4)

    z_size = 32
    d = 128
    params = init_params(kp, z_size, d)

    # --- test 1: small batch, single tile, single panel ---
    batch = 8
    x = jax.random.normal(kx, (batch, z_size), jnp.float32)
    out = jax.block_until_ready(zdiscriminator_forward(x, params))
    ref = _reference_f32(x, params)
    assert out.shape == (batch, 1), out.shape
    # bf16 matmuls / bf16 layer-1 activations => compare to f32 reference loosely.
    assert jnp.allclose(out, ref, atol=2e-2, rtol=0), "mismatch vs f32 reference"

    # --- test 2: non-multiple batch with a small forced tile (multi-step grid,
    #             ragged last block handled by Pallas, no wrapper padding) ---
    batch2 = 20
    x2 = jax.random.normal(kx2, (batch2, z_size), jnp.float32)
    out2 = jax.block_until_ready(zdiscriminator_forward(x2, params, tile_b=8))
    ref2 = _reference_f32(x2, params)
    assert out2.shape == (batch2, 1), out2.shape
    assert jnp.allclose(out2, ref2, atol=2e-2, rtol=0), "mismatch vs f32 reference (tiled)"

    # --- test 3: larger batch exercising the multi-panel inner loop
    #             (tb=512 -> 2x 256-row panels) plus a ragged final tile ---
    batch3 = 1100
    x3 = jax.random.normal(kx3, (batch3, z_size), jnp.float32)
    out3 = jax.block_until_ready(zdiscriminator_forward(x3, params, tile_b=512))
    ref3 = _reference_f32(x3, params)
    assert out3.shape == (batch3, 1), out3.shape
    assert jnp.allclose(out3, ref3, atol=2e-2, rtol=0), "mismatch vs f32 reference (panels)"

    print("KERNEL_OK")
</pallas_src>

<mosaic_0001>
module attributes {stable_mosaic.version = 11 : i64} {
  func.func @_zdisc_kernel(%arg0: i32, %arg1: memref<8x32xf32, #tpu.memory_space<vmem>>, %arg2: memref<32x128xbf16, #tpu.memory_space<vmem>>, %arg3: memref<1x128xbf16, #tpu.memory_space<vmem>>, %arg4: memref<128x128xbf16, #tpu.memory_space<vmem>>, %arg5: memref<1x128xf32, #tpu.memory_space<vmem>>, %arg6: memref<1x128xf32, #tpu.memory_space<vmem>>, %arg7: memref<1x1xf32, #tpu.memory_space<smem>>, %arg8: memref<8x1xf32, #tpu.memory_space<vmem>>) attributes {dimension_semantics = [#tpu.dimension_semantics<parallel>], iteration_bounds = array<i64: 1>, scalar_prefetch = 0 : i64, scratch_operands = 0 : i64, tpu.core_type = #tpu.core_type<tc>, window_params = [{transform_indices = @transform_0, window_bounds = array<i64: 8, 32>}, {pipeline_mode = #tpu.pipeline_mode<synchronous>, transform_indices = @transform_1, window_bounds = array<i64: 32, 128>}, {pipeline_mode = #tpu.pipeline_mode<synchronous>, transform_indices = @transform_2, window_bounds = array<i64: 1, 128>}, {pipeline_mode = #tpu.pipeline_mode<synchronous>, transform_indices = @transform_3, window_bounds = array<i64: 128, 128>}, {pipeline_mode = #tpu.pipeline_mode<synchronous>, transform_indices = @transform_4, window_bounds = array<i64: 1, 128>}, {pipeline_mode = #tpu.pipeline_mode<synchronous>, transform_indices = @transform_5, window_bounds = array<i64: 1, 128>}, {transform_indices = @transform_6, window_bounds = array<i64: 1, 1>}, {transform_indices = @transform_7, window_bounds = array<i64: 8, 1>}]} {
    %c0_i32 = arith.constant 0 : i32
    %c8_i32 = arith.constant 8 : i32
    %0 = arith.muli %c0_i32, %c8_i32 : i32
    %1 = arith.index_cast %0 : i32 to index
    %c0 = arith.constant 0 : index
    %2 = vector.load %arg1[%1, %c0] : memref<8x32xf32, #tpu.memory_space<vmem>>, vector<8x32xf32>
    %3 = arith.truncf %2 : vector<8x32xf32> to vector<8x32xbf16>
    %c0_0 = arith.constant 0 : index
    %c0_1 = arith.constant 0 : index
    %4 = vector.load %arg2[%c0_0, %c0_1] : memref<32x128xbf16, #tpu.memory_space<vmem>>, vector<32x128xbf16>
    %cst = arith.constant dense<0.000000e+00> : vector<8x128xf32>
    %5 = tpu.matmul %3, %4, %cst {dimension_numbers = #tpu.dot_dimension_numbers<[1], [0], [0], [1], [0, 0, 1, 1], [], []>} : vector<8x32xbf16>, vector<32x128xbf16>, vector<8x128xf32> -> vector<8x128xf32>
    %6 = arith.truncf %5 : vector<8x128xf32> to vector<8x128xbf16>
    %c0_2 = arith.constant 0 : index
    %c0_3 = arith.constant 0 : index
    %7 = vector.load %arg3[%c0_2, %c0_3] : memref<1x128xbf16, #tpu.memory_space<vmem>>, vector<1x128xbf16>
    %8 = vector.broadcast %7 : vector<1x128xbf16> to vector<8x128xbf16>
    %9 = arith.addf %6, %8 : vector<8x128xbf16>
    %cst_4 = arith.constant 2.001950e-01 : bf16
    %10 = vector.broadcast %cst_4 : bf16 to vector<8x128xbf16>
    %11 = arith.mulf %10, %9 : vector<8x128xbf16>
    %12 = arith.maximumf %9, %11 : vector<8x128xbf16>
    %c0_5 = arith.constant 0 : index
    %c0_6 = arith.constant 0 : index
    %13 = vector.load %arg4[%c0_5, %c0_6] : memref<128x128xbf16, #tpu.memory_space<vmem>>, vector<128x128xbf16>
    %cst_7 = arith.constant dense<0.000000e+00> : vector<8x128xf32>
    %14 = tpu.matmul %12, %13, %cst_7 {dimension_numbers = #tpu.dot_dimension_numbers<[1], [0], [0], [1], [0, 0, 1, 1], [], []>} : vector<8x128xbf16>, vector<128x128xbf16>, vector<8x128xf32> -> vector<8x128xf32>
    %c0_8 = arith.constant 0 : index
    %c0_9 = arith.constant 0 : index
    %15 = vector.load %arg5[%c0_8, %c0_9] : memref<1x128xf32, #tpu.memory_space<vmem>>, vector<1x128xf32>
    %16 = vector.broadcast %15 : vector<1x128xf32> to vector<8x128xf32>
    %17 = arith.addf %14, %16 : vector<8x128xf32>
    %cst_10 = arith.constant 2.000000e-01 : f32
    %18 = vector.broadcast %cst_10 : f32 to vector<8x128xf32>
    %19 = arith.mulf %18, %17 : vector<8x128xf32>
    %20 = arith.maximumf %17, %19 : vector<8x128xf32>
    %c0_11 = arith.constant 0 : index
    %c0_12 = arith.constant 0 : index
    %21 = vector.load %arg6[%c0_11, %c0_12] : memref<1x128xf32, #tpu.memory_space<vmem>>, vector<1x128xf32>
    %22 = vector.broadcast %21 : vector<1x128xf32> to vector<8x128xf32>
    %23 = arith.mulf %20, %22 : vector<8x128xf32>
    %cst_13 = arith.constant dense<0.000000e+00> : vector<8xf32>
    %24 = vector.multi_reduction <add>, %23, %cst_13 [1] : vector<8x128xf32> to vector<8xf32>
    %25 = vector.shape_cast %24 : vector<8xf32> to vector<8x1xf32>
    %c0_14 = arith.constant 0 : index
    %c0_15 = arith.constant 0 : index
    %26 = memref.load %arg7[%c0_14, %c0_15] : memref<1x1xf32, #tpu.memory_space<smem>>
    %27 = vector.broadcast %26 : f32 to vector<8x1xf32>
    %28 = arith.addf %25, %27 : vector<8x1xf32>
    %cst_16 = arith.constant 0.000000e+00 : f32
    %29 = vector.broadcast %cst_16 : f32 to vector<8x1xf32>
    %30 = arith.subf %29, %28 : vector<8x1xf32>
    %31 = math.exp %30 : vector<8x1xf32>
    %cst_17 = arith.constant 1.000000e+00 : f32
    %32 = vector.broadcast %cst_17 : f32 to vector<8x1xf32>
    %33 = arith.addf %32, %31 : vector<8x1xf32>
    %cst_18 = arith.constant 1.000000e+00 : f32
    %34 = vector.broadcast %cst_18 : f32 to vector<8x1xf32>
    %35 = arith.divf %34, %33 : vector<8x1xf32>
    %36 = arith.index_cast %0 : i32 to index
    %c0_19 = arith.constant 0 : index
    %37 = vector.load %arg8[%36, %c0_19] : memref<8x1xf32, #tpu.memory_space<vmem>>, vector<8x1xf32>
    tpu.vector_store %arg8[%36, %c0_19], %35 {strides = array<i32>} : memref<8x1xf32, #tpu.memory_space<vmem>>, vector<8x1xf32>,
    %c1_i32 = arith.constant 1 : i32
    return
  }
  func.func @transform_0(%arg0: i32) -> (i32, i32) {
    %c0_i32 = arith.constant 0 : i32
    %c0_i32_0 = arith.constant 0 : i32
    return %arg0, %c0_i32 : i32, i32
  }
  func.func @transform_1(%arg0: i32) -> (i32, i32) {
    %c0_i32 = arith.constant 0 : i32
    %c0_i32_0 = arith.constant 0 : i32
    %c0_i32_1 = arith.constant 0 : i32
    return %c0_i32, %c0_i32_0 : i32, i32
  }
  func.func @transform_2(%arg0: i32) -> (i32, i32) {
    %c0_i32 = arith.constant 0 : i32
    %c0_i32_0 = arith.constant 0 : i32
    %c0_i32_1 = arith.constant 0 : i32
    return %c0_i32, %c0_i32_0 : i32, i32
  }
  func.func @transform_3(%arg0: i32) -> (i32, i32) {
    %c0_i32 = arith.constant 0 : i32
    %c0_i32_0 = arith.constant 0 : i32
    %c0_i32_1 = arith.constant 0 : i32
    return %c0_i32, %c0_i32_0 : i32, i32
  }
  func.func @transform_4(%arg0: i32) -> (i32, i32) {
    %c0_i32 = arith.constant 0 : i32
    %c0_i32_0 = arith.constant 0 : i32
    %c0_i32_1 = arith.constant 0 : i32
    return %c0_i32, %c0_i32_0 : i32, i32
  }
  func.func @transform_5(%arg0: i32) -> (i32, i32) {
    %c0_i32 = arith.constant 0 : i32
    %c0_i32_0 = arith.constant 0 : i32
    %c0_i32_1 = arith.constant 0 : i32
    return %c0_i32, %c0_i32_0 : i32, i32
  }
  func.func @transform_6(%arg0: i32) -> (i32, i32) {
    %c0_i32 = arith.constant 0 : i32
    %c0_i32_0 = arith.constant 0 : i32
    %c0_i32_1 = arith.constant 0 : i32
    return %c0_i32, %c0_i32_0 : i32, i32
  }
  func.func @transform_7(%arg0: i32) -> (i32, i32) {
    %c0_i32 = arith.constant 0 : i32
    %c0_i32_0 = arith.constant 0 : i32
    return %arg0, %c0_i32 : i32, i32
  }
}

</mosaic_0001>

<llo_original>
// kernel: zdiscriminator_forward.1
$region0: #{zdiscriminator_forward.1}
  #allocation0 [shape = 'u32[]', space=smem, size = 0x4, offset = 0x4, fixed_abs, tag = 'smem constant byte address 0x4 - core index']
  #allocation1 [shape = 'u32[72,128]{1,0:T(1,128)}', space=vmem, size = 0x9000, scoped, tag = 'internal scratch']
  #allocation2 [shape = 'f32[1,1]{1,0:T(1,128)S(6)}', space=smem, size = 0x200, scoped, tag = 'scoped memory for zdiscriminator_forward.1']
  %s0 = inlined_call_operand.vmem [shape: f32[8,32], index: 0, kind: input, shape index: {}]
  %s1 = inlined_call_operand.vmem [shape: bf16[32,128], index: 1, kind: input, shape index: {}]
  %s2 = inlined_call_operand.vmem [shape: bf16[1,128], index: 2, kind: input, shape index: {}]
  %s3 = inlined_call_operand.vmem [shape: bf16[128,128], index: 3, kind: input, shape index: {}]
  %s4 = inlined_call_operand.vmem [shape: f32[1,128], index: 4, kind: input, shape index: {}]
  %s5 = inlined_call_operand.vmem [shape: f32[1,128], index: 5, kind: input, shape index: {}]
  %s6 = inlined_call_operand.<no memory space> [shape: f32[1,1], index: 6, kind: input, shape index: {}]
  %s7 = inlined_call_operand.vmem [shape: f32[8,1], index: 7, kind: output, shape index: {}]
  %s8 = sld [smem:[#allocation0]]
  $region38: #{zdiscriminator_forward.1} parent=0
    _
  %s10 = ssub.s32 1, %s8
  %s11 = scalar_select 0, %s10, %s8
  %12 = sst [smem:[#allocation2]] %s6
  // Predicated region
  $region2: #{zdiscriminator_forward.1} parent=0 // pred_check
    _
  $region3: #{zdiscriminator_forward.1} parent=0 // pred_check_branch
    %14 = sbr.rel (0) target = $region5
  $region4: #{zdiscriminator_forward.1} parent=0 // pred_region
    _
  $region5: #{zdiscriminator_forward.1} parent=0 // pred_fallthru
    _
  // Predicated region
  $region6: #{zdiscriminator_forward.1} parent=0 // pred_check
    _
  $region7: #{zdiscriminator_forward.1} parent=0 // pred_check_branch
    %16 = sbr.rel (0) target = $region9
  $region8: #{zdiscriminator_forward.1} parent=0 // pred_region
    _
  $region9: #{zdiscriminator_forward.1} parent=0 // pred_fallthru
    _
  // Predicated region
  $region10: #{zdiscriminator_forward.1} parent=0 // pred_check
    _
  $region11: #{zdiscriminator_forward.1} parent=0 // pred_check_branch
    %18 = sbr.rel (0) target = $region13
  $region12: #{zdiscriminator_forward.1} parent=0 // pred_region
    _
  $region13: #{zdiscriminator_forward.1} parent=0 // pred_fallthru
    _
  // Predicated region
  $region14: #{zdiscriminator_forward.1} parent=0 // pred_check
    _
  $region15: #{zdiscriminator_forward.1} parent=0 // pred_check_branch
    %20 = sbr.rel (0) target = $region17
  $region16: #{zdiscriminator_forward.1} parent=0 // pred_region
    _
  $region17: #{zdiscriminator_forward.1} parent=0 // pred_fallthru
    _
  // Predicated region
  $region18: #{zdiscriminator_forward.1} parent=0 // pred_check
    _
  $region19: #{zdiscriminator_forward.1} parent=0 // pred_check_branch
    %22 = sbr.rel (0) target = $region21
  $region20: #{zdiscriminator_forward.1} parent=0 // pred_region
    _
  $region21: #{zdiscriminator_forward.1} parent=0 // pred_fallthru
    _
  // Predicated region
  $region22: #{zdiscriminator_forward.1} parent=0 // pred_check
    _
  $region23: #{zdiscriminator_forward.1} parent=0 // pred_check_branch
    %24 = sbr.rel (0) target = $region25
  $region24: #{zdiscriminator_forward.1} parent=0 // pred_region
    _
  $region25: #{zdiscriminator_forward.1} parent=0 // pred_fallthru
    _
  // Predicated region
  $region26: #{zdiscriminator_forward.1} parent=0 // pred_check
    _
  $region27: #{zdiscriminator_forward.1} parent=0 // pred_check_branch
    %26 = sbr.rel (0) target = $region29
  $region28: #{zdiscriminator_forward.1} parent=0 // pred_region
    _
  $region29: #{zdiscriminator_forward.1} parent=0 // pred_fallthru
    _
  %v28 = vld [vmem:[%s0] sm:$0xff]
  %v29 = vpack.c.bf16 %v28, %v28
  %v30 = vld [vmem:[%s1] sm:$0xf]
  %v31 = vld [vmem:[%s1 + $0x4] sm:$0xf]
  %v32 = vld [vmem:[%s1 + $0x8] sm:$0xf]
  %v33 = vld [vmem:[%s1 + $0xc] sm:$0xf]
  %v38 = vunpack.c.l.b16 %v30
  %v39 = vunpack.c.l.b16 %v31
  %v40 = vunpack.c.l.b16 %v32
  %v41 = vunpack.c.l.b16 %v33
  %v42 = vpack.c.b16 %v39, %v38
  %v43 = vpack.c.b16 %v41, %v40
  %vm46 = vcmask 261120
  %v48 = vsel %vm46, %v29, 0
  %50 = vmatpush.bf16.msra.mxu0 0
  %51 = vmatpush.bf16.msra.mxu0 0
  %52 = vmatpush.bf16.msra.mxu0 0
  %53 = vmatpush.bf16.msra.mxu0 0
  %54 = vmatpush.bf16.msra.mxu0 0
  %55 = vmatpush.bf16.msra.mxu0 0
  %56 = vmatpush.bf16.msra.mxu0 %v43
  %57 = vmatpush.bf16.msra.mxu0 %v42
  %58 = vmatmul.bf16.gmra.mxu0 %v48
  %v59 = vpop.f32.mrf.mxu0
  %v60 = vadd.f32 0.0, %v59
  %v61 = vpop.f32.mrf.mxu0
  %62 = vdwg.mxu0
  %v63 = vpack.c.bf16 %v60, %v60
  %v64 = vld [vmem:[%s2] sm:$0x1]
  %v66 = vpack.i.b16 %v64, %v64
  %v68 = vperm.slane %v66, 0
  %v69 = vunpack.c.l.bf16 %v63
  %v70 = vunpack.c.l.bf16 %v68
  %v71 = vadd.f32 %v69, %v70
  %v72 = vpack.c.bf16 %v71, %v71
  %v73 = vunpack.c.l.bf16 %v72
  %v74 = vmul.f32 %v73, 0.20019531
  %v75 = vpack.c.bf16 %v74, %v74
  %v76 = vunpack.c.l.bf16 %v75
  %v77 = vmax.f32 %v73, %v76
  %v78 = vpack.c.bf16 %v77, %v77
  %v79 = vld [vmem:[%s3] sm:$0xf]
  %v80 = vld [vmem:[%s3 + $0x4] sm:$0xf]
  %v81 = vld [vmem:[%s3 + $0x8] sm:$0xf]
  %v82 = vld [vmem:[%s3 + $0xc] sm:$0xf]
  %v83 = vld [vmem:[%s3 + $0x10] sm:$0xf]
  %v84 = vld [vmem:[%s3 + $0x14] sm:$0xf]
  %v85 = vld [vmem:[%s3 + $0x18] sm:$0xf]
  %v86 = vld [vmem:[%s3 + $0x1c] sm:$0xf]
  %v87 = vld [vmem:[%s3 + $0x20] sm:$0xf]
  %v88 = vld [vmem:[%s3 + $0x24] sm:$0xf]
  %v89 = vld [vmem:[%s3 + $0x28] sm:$0xf]
  %v90 = vld [vmem:[%s3 + $0x2c] sm:$0xf]
  %v91 = vld [vmem:[%s3 + $0x30] sm:$0xf]
  %v92 = vld [vmem:[%s3 + $0x34] sm:$0xf]
  %v93 = vld [vmem:[%s3 + $0x38] sm:$0xf]
  %v94 = vld [vmem:[%s3 + $0x3c] sm:$0xf]
  %v95 = vld [vmem:[%s4] sm:$0x1]
  %v97 = vperm.slane %v95, 0
  %v115 = vunpack.c.l.b16 %v79
  %v116 = vunpack.c.l.b16 %v80
  %v117 = vunpack.c.l.b16 %v81
  %v118 = vunpack.c.l.b16 %v82
  %v119 = vunpack.c.l.b16 %v83
  %v120 = vunpack.c.l.b16 %v84
  %v121 = vunpack.c.l.b16 %v85
  %v122 = vunpack.c.l.b16 %v86
  %v123 = vunpack.c.l.b16 %v87
  %v124 = vunpack.c.l.b16 %v88
  %v125 = vunpack.c.l.b16 %v89
  %v126 = vunpack.c.l.b16 %v90
  %v127 = vunpack.c.l.b16 %v91
  %v128 = vunpack.c.l.b16 %v92
  %v129 = vunpack.c.l.b16 %v93
  %v130 = vunpack.c.l.b16 %v94
  %v131 = vpack.c.b16 %v116, %v115
  %v132 = vpack.c.b16 %v118, %v117
  %v133 = vpack.c.b16 %v120, %v119
  %v134 = vpack.c.b16 %v122, %v121
  %v135 = vpack.c.b16 %v124, %v123
  %v136 = vpack.c.b16 %v126, %v125
  %v137 = vpack.c.b16 %v128, %v127
  %v138 = vpack.c.b16 %v130, %v129
  %147 = vmatpush.bf16.msra.mxu0 %v138
  %148 = vmatpush.bf16.msra.mxu0 %v137
  %149 = vmatpush.bf16.msra.mxu0 %v136
  %150 = vmatpush.bf16.msra.mxu0 %v135
  %151 = vmatpush.bf16.msra.mxu0 %v134
  %152 = vmatpush.bf16.msra.mxu0 %v133
  %153 = vmatpush.bf16.msra.mxu0 %v132
  %154 = vmatpush.bf16.msra.mxu0 %v131
  %155 = vmatmul.bf16.gmra.mxu0 %v78
  %v156 = vpop.f32.mrf.mxu0
  %v157 = vadd.f32 %v97, %v156
  %v158 = vpop.f32.mrf.mxu0
  %159 = vdwg.mxu0
  %v160 = vmul.f32 %v157, 0.2
  %v161 = vmax.f32 %v157, %v160
  %v162 = vld [vmem:[%s5] sm:$0x1]
  %v164 = vperm.slane %v162, 0
  %v166 = vmul.f32 %v161, %v164
  %167 = vadd.xlane.f32.xlu0 %v166
  %v168 = vpop.xlane.xlu0 %167
  %s169 = sld [smem:[#allocation2]]
  %v170 = vstv %s169
  %v171 = vadd.f32 %v168, %v170
  %v172 = vsub.f32 0.0, %v171
  %v173 = vmul.f32 %v172, 1.442695
  %v174 = vpow.pop %v173
  %v175 = vadd.f32 %v174, 1.0
  %v176 = vrcp.pop %v175
  %v177 = vmul.f32 %v175, %v176
  %v178 = vsub.f32 1.0, %v177
  %v179 = vmul.f32 %v176, %v178
  %v180 = vadd.f32 %v176, %v179
  %vm181 = vweird.f32 %v175
  %vm182 = vweird.f32 %v176
  %vm183 = vmor %vm181, %vm182
  %v184 = vsel %vm183, %v176, %v180
  %v185 = vand.u32 2147483647, %v175
  %vm186 = vcmp.eq.f32.partialorder %v185, 8.507059e+37
  %v187 = vand.u32 %v175, 2147483648
  %v188 = vor.u32 1.1754944e-38, %v187
  %v189 = vsel %vm186, %v188, %v184
  %v190 = vmul.f32 1.0, %v189
  %vm191 = vcmask 7168
  %192 = vst.msk [vmem:[%s7] sm:$0xff] %vm191, %v190
  // Predicated region
  $region30: #{zdiscriminator_forward.1} parent=0 // pred_check
    _
  $region31: #{zdiscriminator_forward.1} parent=0 // pred_check_branch
    %194 = sbr.rel (0) target = $region33
  $region32: #{zdiscriminator_forward.1} parent=0 // pred_region
    _
  $region33: #{zdiscriminator_forward.1} parent=0 // pred_fallthru
    _
  // Predicated region
  $region34: #{zdiscriminator_forward.1} parent=0 // pred_check
    _
  $region35: #{zdiscriminator_forward.1} parent=0 // pred_check_branch
    %196 = sbr.rel (0) target = $region37
  $region36: #{zdiscriminator_forward.1} parent=0 // pred_region
    _
  $region37: #{zdiscriminator_forward.1} parent=0 // pred_fallthru
    _

</llo_original>
